<compile_context>
chip_gen: v5e
topology: v5e:2x2
jax: 0.10.0
libtpu: 0.0.40
codegen_flags: <defaults>
</compile_context>

<pallas_src>
import jax
import jax.numpy as jnp
from jax.experimental import pallas as pl
from jax.experimental.pallas import tpu as pltpu


def mlp_kernel(x_ref, w1_ref, b1_ref, w2_ref, b2_ref, o_ref):
    # fc1: [TB, I] @ [I, H] + [1, H], f32 accumulation on the MXU.
    h = jnp.dot(x_ref[...], w1_ref[...], preferred_element_type=jnp.float32)
    h = jnp.maximum(h + b1_ref[...], 0.0)
    # Mixed precision only when operands are narrower than f32 (bf16 path);
    # no-op cast is omitted for the f32 path.
    if h.dtype != w2_ref.dtype:
        h = h.astype(w2_ref.dtype)
    # out: [TB, H] @ [H, O] + [1, O]
    y = jnp.dot(h, w2_ref[...], preferred_element_type=jnp.float32)
    o_ref[...] = (y + b2_ref[...]).astype(o_ref.dtype)


def nn_forward(x, w1, b1, w2, b2, *, tile_b=1024,
               compute_dtype=jnp.bfloat16, out_dtype=None):
    """Fused fc1 -> ReLU -> out.

    x  : [B, I]
    w1 : [I, H]   (transposed PyTorch fc1.weight)
    b1 : [H]
    w2 : [H, O]   (transposed PyTorch out.weight)
    b2 : [O]
    compute_dtype: dtype of x / weights fed to the MXU (default bf16;
                   accumulation and biases stay f32).
    out_dtype    : output dtype (default x.dtype).
    returns [B, O]
    """
    B, I = x.shape
    I2, H = w1.shape
    H2, O = w2.shape
    assert I2 == I and H2 == H and b1.shape == (H,) and b2.shape == (O,)

    compute_dtype = jnp.dtype(compute_dtype)
    out_dtype = jnp.dtype(out_dtype) if out_dtype is not None else x.dtype

    SUB = 8

    def round_up(a, m):
        return ((a + m - 1) // m) * m

    # Batch tile: multiple of 8 sublanes, capped at tile_b (<=1024), not larger
    # than the (8-rounded) batch, and small enough that the grid has >= 2 steps
    # whenever B >= 16 so both v7x TensorCores get work.
    tb = max(SUB, min((tile_b // SUB) * SUB, round_up(B, SUB)))
    if B >= 2 * SUB:
        tb = min(tb, round_up(pl.cdiv(B, 2), SUB))
    grid = (pl.cdiv(B, tb),)

    # Only cast when needed (f32 path has zero wrapper ops on x / weights).
    xc = x if x.dtype == compute_dtype else x.astype(compute_dtype)
    w1c = w1 if w1.dtype == compute_dtype else w1.astype(compute_dtype)
    w2c = w2 if w2.dtype == compute_dtype else w2.astype(compute_dtype)
    b1r = b1.astype(jnp.float32).reshape(1, H)
    b2r = b2.astype(jnp.float32).reshape(1, O)

    # Cost estimate from true (unpadded) dims / dtypes.
    isz = compute_dtype.itemsize
    flops = 2 * B * (I * H + H * O)
    bytes_accessed = (B * I * isz            # x
                      + I * H * isz          # w1
                      + H * 4                # b1 (f32)
                      + H * O * isz          # w2
                      + O * 4                # b2 (f32)
                      + B * O * out_dtype.itemsize)  # out

    return pl.pallas_call(
        mlp_kernel,
        out_shape=jax.ShapeDtypeStruct((B, O), out_dtype),
        grid=grid,
        in_specs=[
            pl.BlockSpec((tb, I), lambda i: (i, 0)),   # x tile, moves with i
            pl.BlockSpec((I, H), lambda i: (0, 0)),    # w1, VMEM-resident
            pl.BlockSpec((1, H), lambda i: (0, 0)),    # b1, VMEM-resident
            pl.BlockSpec((H, O), lambda i: (0, 0)),    # w2, VMEM-resident
            pl.BlockSpec((1, O), lambda i: (0, 0)),    # b2, VMEM-resident
        ],
        out_specs=pl.BlockSpec((tb, O), lambda i: (i, 0)),
        compiler_params=pltpu.CompilerParams(
            dimension_semantics=("parallel",)),
        cost_estimate=pl.CostEstimate(
            flops=flops, transcendentals=0, bytes_accessed=bytes_accessed),
    )(xc, w1c, b1r, w2c, b2r)


def reference_forward(x, w1, b1, w2, b2):
    h = jnp.maximum(x @ w1 + b1, 0.0)
    return h @ w2 + b2


if __name__ == "__main__":
    # Small shapes consistent with NN(input_size, hidden_size, output_size)
    batch = 8
    input_size = 64
    hidden_size = 32
    output_size = 10

    key = jax.random.PRNGKey(0)
    kx, kw1, kb1, kw2, kb2 = jax.random.split(key, 5)

    x = jax.random.normal(kx, (batch, input_size), dtype=jnp.float32)

    # Deterministic init mimicking nn.Linear (uniform(-1/sqrt(fan_in), ...)).
    lim1 = 1.0 / jnp.sqrt(jnp.float32(input_size))
    w1 = jax.random.uniform(kw1, (input_size, hidden_size),
                            minval=-lim1, maxval=lim1, dtype=jnp.float32)
    b1 = jax.random.uniform(kb1, (hidden_size,),
                            minval=-lim1, maxval=lim1, dtype=jnp.float32)

    lim2 = 1.0 / jnp.sqrt(jnp.float32(hidden_size))
    w2 = jax.random.uniform(kw2, (hidden_size, output_size),
                            minval=-lim2, maxval=lim2, dtype=jnp.float32)
    b2 = jax.random.uniform(kb2, (output_size,),
                            minval=-lim2, maxval=lim2, dtype=jnp.float32)

    ref = reference_forward(x, w1, b1, w2, b2)

    # Default bf16-operand path (MXU-native on v5e/v6e/v7x); looser tolerance.
    out_bf16 = jax.block_until_ready(nn_forward(x, w1, b1, w2, b2))
    assert out_bf16.shape == (batch, output_size)
    assert jnp.allclose(out_bf16, ref, atol=5e-2, rtol=5e-2), \
        "bf16 path mismatch vs reference"

    # Explicit f32 path (strict comparison vs reference).
    out_f32 = jax.block_until_ready(
        nn_forward(x, w1, b1, w2, b2, compute_dtype=jnp.float32))
    assert out_f32.shape == (batch, output_size)
    assert jnp.allclose(out_f32, ref, atol=1e-5, rtol=1e-5), \
        "f32 path mismatch vs reference"

    # Ragged batch (B=20 -> tile_b=16, grid=2, masked edge tile) - exercises
    # the multi-step parallel grid and non-dividing batch handling.
    xr = jax.random.normal(jax.random.PRNGKey(1), (20, input_size),
                           dtype=jnp.float32)
    out_r = jax.block_until_ready(
        nn_forward(xr, w1, b1, w2, b2, compute_dtype=jnp.float32))
    ref_r = reference_forward(xr, w1, b1, w2, b2)
    assert out_r.shape == (20, output_size)
    assert jnp.allclose(out_r, ref_r, atol=1e-5, rtol=1e-5), \
        "ragged-batch mismatch vs reference"

    print("KERNEL_OK")
</pallas_src>

<mosaic_0001>
module attributes {stable_mosaic.version = 11 : i64} {
  func.func @mlp_kernel(%arg0: i32, %arg1: memref<8x64xbf16, #tpu.memory_space<vmem>>, %arg2: memref<64x32xbf16, #tpu.memory_space<vmem>>, %arg3: memref<1x32xf32, #tpu.memory_space<vmem>>, %arg4: memref<32x10xbf16, #tpu.memory_space<vmem>>, %arg5: memref<1x10xf32, #tpu.memory_space<vmem>>, %arg6: memref<8x10xf32, #tpu.memory_space<vmem>>) attributes {dimension_semantics = [#tpu.dimension_semantics<parallel>], iteration_bounds = array<i64: 1>, scalar_prefetch = 0 : i64, scratch_operands = 0 : i64, tpu.core_type = #tpu.core_type<tc>, window_params = [{transform_indices = @transform_0, window_bounds = array<i64: 8, 64>}, {pipeline_mode = #tpu.pipeline_mode<synchronous>, transform_indices = @transform_1, window_bounds = array<i64: 64, 32>}, {pipeline_mode = #tpu.pipeline_mode<synchronous>, transform_indices = @transform_2, window_bounds = array<i64: 1, 32>}, {pipeline_mode = #tpu.pipeline_mode<synchronous>, transform_indices = @transform_3, window_bounds = array<i64: 32, 10>}, {pipeline_mode = #tpu.pipeline_mode<synchronous>, transform_indices = @transform_4, window_bounds = array<i64: 1, 10>}, {transform_indices = @transform_5, window_bounds = array<i64: 8, 10>}]} {
    %c0 = arith.constant 0 : index
    %c0_0 = arith.constant 0 : index
    %0 = vector.load %arg1[%c0, %c0_0] : memref<8x64xbf16, #tpu.memory_space<vmem>>, vector<8x64xbf16>
    %c0_1 = arith.constant 0 : index
    %c0_2 = arith.constant 0 : index
    %1 = vector.load %arg2[%c0_1, %c0_2] : memref<64x32xbf16, #tpu.memory_space<vmem>>, vector<64x32xbf16>
    %cst = arith.constant dense<0.000000e+00> : vector<8x32xf32>
    %2 = tpu.matmul %0, %1, %cst {dimension_numbers = #tpu.dot_dimension_numbers<[1], [0], [0], [1], [0, 0, 1, 1], [], []>} : vector<8x64xbf16>, vector<64x32xbf16>, vector<8x32xf32> -> vector<8x32xf32>
    %c0_3 = arith.constant 0 : index
    %c0_4 = arith.constant 0 : index
    %3 = vector.load %arg3[%c0_3, %c0_4] : memref<1x32xf32, #tpu.memory_space<vmem>>, vector<1x32xf32>
    %4 = vector.broadcast %3 : vector<1x32xf32> to vector<8x32xf32>
    %5 = arith.addf %2, %4 : vector<8x32xf32>
    %cst_5 = arith.constant 0.000000e+00 : f32
    %6 = vector.broadcast %cst_5 : f32 to vector<8x32xf32>
    %7 = arith.maximumf %5, %6 : vector<8x32xf32>
    %8 = arith.truncf %7 : vector<8x32xf32> to vector<8x32xbf16>
    %c0_6 = arith.constant 0 : index
    %c0_7 = arith.constant 0 : index
    %9 = vector.load %arg4[%c0_6, %c0_7] : memref<32x10xbf16, #tpu.memory_space<vmem>>, vector<32x10xbf16>
    %cst_8 = arith.constant dense<0.000000e+00> : vector<8x10xf32>
    %10 = tpu.matmul %8, %9, %cst_8 {dimension_numbers = #tpu.dot_dimension_numbers<[1], [0], [0], [1], [0, 0, 1, 1], [], []>} : vector<8x32xbf16>, vector<32x10xbf16>, vector<8x10xf32> -> vector<8x10xf32>
    %c0_9 = arith.constant 0 : index
    %c0_10 = arith.constant 0 : index
    %11 = vector.load %arg5[%c0_9, %c0_10] : memref<1x10xf32, #tpu.memory_space<vmem>>, vector<1x10xf32>
    %12 = vector.broadcast %11 : vector<1x10xf32> to vector<8x10xf32>
    %13 = arith.addf %10, %12 : vector<8x10xf32>
    %c0_11 = arith.constant 0 : index
    %c0_12 = arith.constant 0 : index
    %14 = vector.load %arg6[%c0_11, %c0_12] : memref<8x10xf32, #tpu.memory_space<vmem>>, vector<8x10xf32>
    tpu.vector_store %arg6[%c0_11, %c0_12], %13 {strides = array<i32>} : memref<8x10xf32, #tpu.memory_space<vmem>>, vector<8x10xf32>,
    return
  }
  func.func @transform_0(%arg0: i32) -> (i32, i32) {
    %c0_i32 = arith.constant 0 : i32
    %c0_i32_0 = arith.constant 0 : i32
    return %arg0, %c0_i32 : i32, i32
  }
  func.func @transform_1(%arg0: i32) -> (i32, i32) {
    %c0_i32 = arith.constant 0 : i32
    %c0_i32_0 = arith.constant 0 : i32
    %c0_i32_1 = arith.constant 0 : i32
    return %c0_i32, %c0_i32_0 : i32, i32
  }
  func.func @transform_2(%arg0: i32) -> (i32, i32) {
    %c0_i32 = arith.constant 0 : i32
    %c0_i32_0 = arith.constant 0 : i32
    %c0_i32_1 = arith.constant 0 : i32
    return %c0_i32, %c0_i32_0 : i32, i32
  }
  func.func @transform_3(%arg0: i32) -> (i32, i32) {
    %c0_i32 = arith.constant 0 : i32
    %c0_i32_0 = arith.constant 0 : i32
    %c0_i32_1 = arith.constant 0 : i32
    return %c0_i32, %c0_i32_0 : i32, i32
  }
  func.func @transform_4(%arg0: i32) -> (i32, i32) {
    %c0_i32 = arith.constant 0 : i32
    %c0_i32_0 = arith.constant 0 : i32
    %c0_i32_1 = arith.constant 0 : i32
    return %c0_i32, %c0_i32_0 : i32, i32
  }
  func.func @transform_5(%arg0: i32) -> (i32, i32) {
    %c0_i32 = arith.constant 0 : i32
    %c0_i32_0 = arith.constant 0 : i32
    return %arg0, %c0_i32 : i32, i32
  }
}

</mosaic_0001>

<llo_original>
// kernel: tpu_custom_call.1
$region0: #{tpu_custom_call.1}
  #allocation0 [shape = 'u32[]', space=smem, size = 0x4, offset = 0x4, fixed_abs, tag = 'smem constant byte address 0x4 - core index']
  #allocation1 [shape = 'u32[72,128]{1,0:T(1,128)}', space=vmem, size = 0x9000, scoped, tag = 'internal scratch']
  %s0 = inlined_call_operand.vmem [shape: bf16[8,64], index: 0, kind: input, shape index: {}]
  %s1 = inlined_call_operand.vmem [shape: bf16[64,32], index: 1, kind: input, shape index: {}]
  %s2 = inlined_call_operand.vmem [shape: f32[1,32], index: 2, kind: input, shape index: {}]
  %s3 = inlined_call_operand.vmem [shape: bf16[32,10], index: 3, kind: input, shape index: {}]
  %s4 = inlined_call_operand.vmem [shape: f32[1,10], index: 4, kind: input, shape index: {}]
  %s5 = inlined_call_operand.hbm [shape: f32[8,10], index: 5, kind: output, shape index: {}]
  %s6 = sld [smem:[#allocation0]]
  $region30: #{tpu_custom_call.1} parent=0
    _
  %s8 = ssub.s32 1, %s6
  %s9 = scalar_select 0, %s8, %s6
  $region1: #{tpu_custom_call.1} parent=0
    #allocation2 [shape = 'u8[4096]{0}', space=vmem, size = 0x1000, scoped, tag = 'output window, operand 0, single buffered']
    #allocation3 [shape = 's32[1]{0}', space=sflag, size = 0x4, scoped, tag = 'scoped memory for tpu_custom_call.1']
    %10 = vsyncpa [#allocation3], 0
    // Predicated region
    $region2: #{tpu_custom_call.1} parent=1 // pred_check
      _
    $region3: #{tpu_custom_call.1} parent=1 // pred_check_branch
      %12 = sbr.rel (0) target = $region5
    $region4: #{tpu_custom_call.1} parent=1 // pred_region
      _
    $region5: #{tpu_custom_call.1} parent=1 // pred_fallthru
      _
    // Predicated region
    $region6: #{tpu_custom_call.1} parent=1 // pred_check
      _
    $region7: #{tpu_custom_call.1} parent=1 // pred_check_branch
      %14 = sbr.rel (0) target = $region9
    $region8: #{tpu_custom_call.1} parent=1 // pred_region
      _
    $region9: #{tpu_custom_call.1} parent=1 // pred_fallthru
      _
    // Predicated region
    $region10: #{tpu_custom_call.1} parent=1 // pred_check
      _
    $region11: #{tpu_custom_call.1} parent=1 // pred_check_branch
      %16 = sbr.rel (0) target = $region13
    $region12: #{tpu_custom_call.1} parent=1 // pred_region
      _
    $region13: #{tpu_custom_call.1} parent=1 // pred_fallthru
      _
    // Predicated region
    $region14: #{tpu_custom_call.1} parent=1 // pred_check
      _
    $region15: #{tpu_custom_call.1} parent=1 // pred_check_branch
      %18 = sbr.rel (0) target = $region17
    $region16: #{tpu_custom_call.1} parent=1 // pred_region
      _
    $region17: #{tpu_custom_call.1} parent=1 // pred_fallthru
      _
    // Predicated region
    $region18: #{tpu_custom_call.1} parent=1 // pred_check
      _
    $region19: #{tpu_custom_call.1} parent=1 // pred_check_branch
      %20 = sbr.rel (0) target = $region21
    $region20: #{tpu_custom_call.1} parent=1 // pred_region
      _
    $region21: #{tpu_custom_call.1} parent=1 // pred_fallthru
      _
    %v22 = vld [vmem:[%s0] sm:$0xf]
    %v23 = vld [vmem:[%s1] sm:$0xf]
    %v24 = vld [vmem:[%s1 + $0x4] sm:$0xf]
    %v25 = vld [vmem:[%s1 + $0x8] sm:$0xf]
    %v26 = vld [vmem:[%s1 + $0xc] sm:$0xf]
    %v27 = vld [vmem:[%s1 + $0x10] sm:$0xf]
    %v28 = vld [vmem:[%s1 + $0x14] sm:$0xf]
    %v29 = vld [vmem:[%s1 + $0x18] sm:$0xf]
    %v30 = vld [vmem:[%s1 + $0x1c] sm:$0xf]
    %v31 = vld [vmem:[%s2] sm:$0x1]
    %v33 = vperm.slane %v31, 0
    %v43 = vunpack.c.l.b16 %v23
    %v44 = vunpack.c.l.b16 %v24
    %v45 = vunpack.c.l.b16 %v25
    %v46 = vunpack.c.l.b16 %v26
    %v47 = vunpack.c.l.b16 %v27
    %v48 = vunpack.c.l.b16 %v28
    %v49 = vunpack.c.l.b16 %v29
    %v50 = vunpack.c.l.b16 %v30
    %v51 = vpack.c.b16 %v44, %v43
    %v52 = vpack.c.b16 %v46, %v45
    %v53 = vpack.c.b16 %v48, %v47
    %v54 = vpack.c.b16 %v50, %v49
    %vm59 = vcmask 523264
    %v61 = vsel %vm59, %v22, 0
    %63 = vmatpush.bf16.msra.mxu0 0
    %64 = vmatpush.bf16.msra.mxu0 0
    %65 = vmatpush.bf16.msra.mxu0 0
    %66 = vmatpush.bf16.msra.mxu0 0
    %67 = vmatpush.bf16.msra.mxu0 %v54
    %68 = vmatpush.bf16.msra.mxu0 %v53
    %69 = vmatpush.bf16.msra.mxu0 %v52
    %70 = vmatpush.bf16.msra.mxu0 %v51
    %71 = vmatmul.bf16.gmra.mxu0 %v61
    %v72 = vpop.f32.mrf.mxu0
    %v73 = vadd.f32 %v33, %v72
    %v74 = vpop.f32.mrf.mxu0
    %75 = vdwg.mxu0
    %v76 = vmax.f32 %v73, 0.0
    %v77 = vpack.c.bf16 %v76, %v76
    %v78 = vld [vmem:[%s3] sm:$0xf]
    %v79 = vld [vmem:[%s3 + $0x4] sm:$0xf]
    %v80 = vld [vmem:[%s3 + $0x8] sm:$0xf]
    %v81 = vld [vmem:[%s3 + $0xc] sm:$0xf]
    %v82 = vld [vmem:[%s4] sm:$0x1]
    %v84 = vperm.slane %v82, 0
    %v90 = vunpack.c.l.b16 %v78
    %v91 = vunpack.c.l.b16 %v79
    %v92 = vunpack.c.l.b16 %v80
    %v93 = vunpack.c.l.b16 %v81
    %v94 = vpack.c.b16 %v91, %v90
    %v95 = vpack.c.b16 %v93, %v92
    %vm98 = vcmask 261120
    %v100 = vsel %vm98, %v77, 0
    %102 = vmatpush.bf16.msra.mxu0 0
    %103 = vmatpush.bf16.msra.mxu0 0
    %104 = vmatpush.bf16.msra.mxu0 0
    %105 = vmatpush.bf16.msra.mxu0 0
    %106 = vmatpush.bf16.msra.mxu0 0
    %107 = vmatpush.bf16.msra.mxu0 0
    %108 = vmatpush.bf16.msra.mxu0 %v95
    %109 = vmatpush.bf16.msra.mxu0 %v94
    %110 = vmatmul.bf16.gmra.mxu0 %v100
    %v111 = vpop.f32.mrf.mxu0
    %v112 = vadd.f32 %v84, %v111
    %v113 = vpop.f32.mrf.mxu0
    %114 = vdwg.mxu0
    %vm115 = vcmask 80896
    %116 = vst.msk [vmem:[#allocation2] sm:$0xff] %vm115, %v112
    // Predicated region
    $region22: #{tpu_custom_call.1} parent=1 // pred_check
      _
    $region23: #{tpu_custom_call.1} parent=1 // pred_check_branch
      %118 = sbr.rel (0) target = $region25
    $region24: #{tpu_custom_call.1} parent=1 // pred_region
      %120 = vsyncadd [#allocation3], 0
      %s122 = sshll.u32 [#allocation2], 4
      %s123 = int_to_ptr.vmem [resolvable:$true] %s122
      %s124 = sshll.u32 %s5, 4
      %s125 = int_to_ptr.hbm [resolvable:$true] %s124
      %127 = dma.vmem_to_hbm [thread:$0]  %s123, 128, %s125, [#allocation3]
    $region25: #{tpu_custom_call.1} parent=1 // pred_fallthru
      _
    // Predicated region
    $region26: #{tpu_custom_call.1} parent=1 // pred_check
      _
    $region27: #{tpu_custom_call.1} parent=1 // pred_check_branch
      %129 = sbr.rel (0) target = $region29
    $region28: #{tpu_custom_call.1} parent=1 // pred_region
      %131 = dma.done [#allocation3], 128
    $region29: #{tpu_custom_call.1} parent=1 // pred_fallthru
      _
    %132 = vsyncpa [#allocation3], 1

</llo_original>
